<compile_context>
chip_gen: v6e
topology: v6e:2x2x1
jax: 0.10.0
libtpu: 0.0.40
codegen_flags: <defaults>
</compile_context>

<pallas_src>
import functools

import jax
import jax.numpy as jnp
import numpy as np
from jax import lax
from jax.experimental import pallas as pl
from jax.experimental.pallas import tpu as pltpu

# ----- synthetic hyperparameters (mirror hps.* names, small sizes) -----------
ATTENTION_LOCATION_FILTERS = 8      # F
ATTENTION_LOCATION_KERNEL_SIZE = 5  # K (odd -> 'same' padding)
ATTENTION_DIM = 32                  # A
DECODER_RNN_HIDDEN_DIM = 16         # D   (rnn_hs_linear input is 2*D)
ENCODER_LSTM_DIM = 16               # encoder_output feature dim is 2*ENCODER_LSTM_DIM
BATCH = 2
SEQ_LEN = 16

F = ATTENTION_LOCATION_FILTERS
K = ATTENTION_LOCATION_KERNEL_SIZE
P = (K - 1) // 2
A = ATTENTION_DIM
D = DECODER_RNN_HIDDEN_DIM
D2 = 2 * D
E2 = 2 * ENCODER_LSTM_DIM


def _attention_kernel(loc_ref, rnn_ref, proc_ref, enc_ref,
                      wk_ref, wrnn_ref, walign_ref,
                      att_ref, align_ref):
    """loc=(B,S,1) rnn=(2,B,D) proc=(B,S,A) enc=(B,S,E2)
       wk=(K,A) wrnn=(2,D,A) walign=(1,1,A) -> att=(B,1,E2), align=(B,S,1)."""
    B, S, A_ = proc_ref.shape
    K_ = wk_ref.shape[0]
    P_ = (K_ - 1) // 2

    # rnn_hs_linear: cat(rnn_hs[0], rnn_hs[1]) @ W == rnn[0] @ W[:D] + rnn[1] @ W[D:]
    rnn_proc = (jnp.dot(rnn_ref[0], wrnn_ref[0], preferred_element_type=jnp.float32)
                + jnp.dot(rnn_ref[1], wrnn_ref[1], preferred_element_type=jnp.float32))

    # location Conv1d('same', no bias) fused with location_linear:
    #   loc_proc[b, s, :] = sum_k loc[b, s + k - P] * wk[k, :]
    # executed as K shifted VPU MACs; shift = sublane roll (XLU) + zero-pad mask.
    loc = loc_ref[...]                                        # (B, S, 1), S on sublanes
    wk = wk_ref[...]                                          # (K, A)
    sidx = lax.broadcasted_iota(jnp.int32, (B, S, 1), 1)
    loc_proc = loc * wk[P_][None, None, :]                    # d == 0 tap: no roll/mask
    for k in range(K_):
        d = k - P_
        if d == 0:
            continue
        shifted = pltpu.roll(loc, shift=(-d) % S, axis=1)     # circular shift by d
        shifted = jnp.where((sidx >= -d) & (sidx < S - d),    # 'same' zero padding
                            shifted, 0.0)
        loc_proc = loc_proc + shifted * wk[k][None, None, :]

    # energy = tanh(rnn_proc + loc_proc + processed_encoder_output)   (EUP tanh)
    # TODO(synk): nn.Dropout(0.5) is treated as identity (inference semantics).
    energy = jnp.tanh(rnn_proc[:, None, :] + loc_proc + proc_ref[...])    # (B, S, A)

    # alignments_linear as VPU mul + lane reduce; logits kept (B, S, 1), S on sublanes.
    logits = jnp.sum(energy * walign_ref[...], axis=-1, keepdims=True)    # (B, S, 1)

    # softmax over the sequence (sublane) axis; EXACT reciprocal -- the result
    # feeds the cumulative location feature across autoregressive steps.
    m = jnp.max(logits, axis=1, keepdims=True)
    e = jnp.exp(logits - m)
    align = e * pl.reciprocal(jnp.sum(e, axis=1, keepdims=True), approx=False)

    # attention score: (enc^T @ align)^T == sum_s enc * align (sublane reduce);
    # alignment broadcasts over the E2 lane axis -> no transpose on the hot path.
    att_ref[...] = jnp.sum(enc_ref[...] * align, axis=1,
                           keepdims=True).astype(att_ref.dtype)           # (B, 1, E2)
    align_ref[...] = align.astype(align_ref.dtype)                        # (B, S, 1)


def fuse_params(params):
    """Weights-only fold, done ONCE at model init (NOT per decoder step):
       wk     = Conv1d weight (F, K)  x  location_linear (F, A)  -> (K, A)
       wrnn   = rnn_hs_linear (2D, A) split to match torch.cat   -> (2, D, A)
       walign = alignments_linear (1, A)                         -> (1, 1, A)
    """
    w_conv, w_loc, w_rnn, w_align = params
    wk = jnp.einsum('fk,fa->ka', w_conv, w_loc)
    wrnn = w_rnn.reshape(2, w_rnn.shape[0] // 2, w_rnn.shape[1])
    walign = w_align.reshape(1, 1, w_align.shape[-1])
    return wk, wrnn, walign


def tacotron2_attention(rnn_hs, encoder_output, processed_encoder_output,
                        location_attention, fused_params, mask=None):
    """rnn_hs (2,B,D), encoder_output (B,S,2E), processed_encoder_output (B,S,A),
    location_attention (B,S,1) -> attention_score (B,1,2E), alignments (B,S,1)."""
    # TODO(synk): masked_fill path not implemented (module is exercised with mask=None).
    assert mask is None
    wk, wrnn, walign = fused_params
    B, S, E2_ = encoder_output.shape
    A_ = processed_encoder_output.shape[-1]
    K_ = wk.shape[0]

    flops = (2 * B * S * (K_ * A_ + A_ + E2_)            # conv MACs + align-linear + weighted sum
             + 2 * B * wrnn.shape[0] * wrnn.shape[1] * A_)  # rnn_hs_linear
    io_bytes = 4 * (location_attention.size + rnn_hs.size
                    + processed_encoder_output.size + encoder_output.size
                    + wk.size + wrnn.size + walign.size + B * E2_ + B * S)
    cost = pl.CostEstimate(flops=flops, transcendentals=B * S * (A_ + 1),
                           bytes_accessed=io_bytes)

    vmem = functools.partial(pl.BlockSpec, memory_space=pltpu.MemorySpace.VMEM)
    att, align = pl.pallas_call(
        _attention_kernel,
        out_shape=(jax.ShapeDtypeStruct((B, 1, E2_), jnp.float32),
                   jax.ShapeDtypeStruct((B, S, 1), jnp.float32)),
        in_specs=[vmem() for _ in range(7)],
        out_specs=(vmem(), vmem()),
        compiler_params=pltpu.CompilerParams(
            # Guard vs. the 16/32 MiB scoped-VMEM defaults if S/B grow while the
            # kernel stays grid-less (tile S before this approaches ~64 MiB on v7x).
            vmem_limit_bytes=int(max(32 * 1024 * 1024, 4 * io_bytes))),
        cost_estimate=cost,
    )(location_attention, rnn_hs, processed_encoder_output, encoder_output,
      wk, wrnn, walign)
    return att, align


def reference(rnn_hs, enc, proc, loc, params):
    """Plain-JAX mirror of the PyTorch forward (unfused; validates the kernel)."""
    w_conv, w_loc, w_rnn, w_align = params
    la = jnp.transpose(loc, (0, 2, 1))                                 # (B, 1, S)
    conv = lax.conv_general_dilated(
        la, w_conv.reshape(F, 1, K), window_strides=(1,),
        padding=[(P, P)], dimension_numbers=('NCH', 'OIH', 'NCH'))     # (B, F, S)
    conv = jnp.transpose(conv, (0, 2, 1))                              # (B, S, F)
    loc_proc = conv @ w_loc                                            # (B, S, A)
    rnn_cat = jnp.concatenate([rnn_hs[0], rnn_hs[1]], axis=1)          # (B, 2D)
    rnn_proc = (rnn_cat @ w_rnn)[:, None, :]                           # (B, 1, A)
    energy = jnp.tanh(rnn_proc + loc_proc + proc)
    logits = energy @ w_align.T                                        # (B, S, 1)
    align = jax.nn.softmax(logits, axis=1)
    att = jnp.transpose(jnp.transpose(enc, (0, 2, 1)) @ align, (0, 2, 1))  # (B, 1, 2E)
    return att, align


if __name__ == "__main__":
    key = jax.random.PRNGKey(0)
    ks = jax.random.split(key, 8)

    # inputs (shapes implied by the PyTorch forward)
    rnn_hs = jax.random.normal(ks[0], (2, BATCH, DECODER_RNN_HIDDEN_DIM), jnp.float32)
    encoder_output = jax.random.normal(ks[1], (BATCH, SEQ_LEN, E2), jnp.float32)
    processed_encoder_output = jax.random.normal(ks[2], (BATCH, SEQ_LEN, A), jnp.float32)
    location_attention = jax.nn.softmax(
        jax.random.normal(ks[3], (BATCH, SEQ_LEN, 1), jnp.float32), axis=1)

    # deterministic parameters (PyTorch weights, pre-transposed to x @ W form)
    w_conv = 0.2 * jax.random.normal(ks[4], (F, K), jnp.float32)   # Conv1d weight (F,1,K) squeezed
    w_loc = 0.2 * jax.random.normal(ks[5], (F, A), jnp.float32)    # location_linear.weight.T
    w_rnn = 0.2 * jax.random.normal(ks[6], (D2, A), jnp.float32)   # rnn_hs_linear.weight.T
    w_align = 0.2 * jax.random.normal(ks[7], (1, A), jnp.float32)  # alignments_linear.weight
    params = (w_conv, w_loc, w_rnn, w_align)

    # Built ONCE (model init), reused for every autoregressive decoder step.
    fused = fuse_params(params)

    att, align = tacotron2_attention(rnn_hs, encoder_output,
                                     processed_encoder_output,
                                     location_attention, fused)
    jax.block_until_ready((att, align))

    ref_att, ref_align = reference(rnn_hs, encoder_output,
                                   processed_encoder_output,
                                   location_attention, params)
    assert att.shape == (BATCH, 1, E2) and align.shape == (BATCH, SEQ_LEN, 1)
    # Tolerance covers MXU default-precision (bf16-pass) matmuls on both sides;
    # the softmax itself now uses an exact reciprocal.
    np.testing.assert_allclose(np.asarray(att), np.asarray(ref_att), rtol=2e-2, atol=2e-2)
    np.testing.assert_allclose(np.asarray(align), np.asarray(ref_align), rtol=2e-2, atol=2e-2)
    print("KERNEL_OK")
</pallas_src>

<mosaic_0001>
module attributes {stable_mosaic.version = 11 : i64} {
  func.func @_attention_kernel(%arg0: memref<2x16x1xf32, #tpu.memory_space<vmem>>, %arg1: memref<2x2x16xf32, #tpu.memory_space<vmem>>, %arg2: memref<2x16x32xf32, #tpu.memory_space<vmem>>, %arg3: memref<2x16x32xf32, #tpu.memory_space<vmem>>, %arg4: memref<5x32xf32, #tpu.memory_space<vmem>>, %arg5: memref<2x16x32xf32, #tpu.memory_space<vmem>>, %arg6: memref<1x1x32xf32, #tpu.memory_space<vmem>>, %arg7: memref<2x1x32xf32, #tpu.memory_space<vmem>>, %arg8: memref<2x16x1xf32, #tpu.memory_space<vmem>>) attributes {dimension_semantics = [], scalar_prefetch = 0 : i64, scratch_operands = 0 : i64, tpu.core_type = #tpu.core_type<tc>} {
    %c0 = arith.constant 0 : index
    %c0_0 = arith.constant 0 : index
    %c0_1 = arith.constant 0 : index
    %0 = vector.load %arg1[%c0, %c0_0, %c0_1] : memref<2x2x16xf32, #tpu.memory_space<vmem>>, vector<1x2x16xf32>
    %1 = vector.shape_cast %0 : vector<1x2x16xf32> to vector<2x16xf32>
    %c0_2 = arith.constant 0 : index
    %c0_3 = arith.constant 0 : index
    %c0_4 = arith.constant 0 : index
    %2 = vector.load %arg5[%c0_2, %c0_3, %c0_4] : memref<2x16x32xf32, #tpu.memory_space<vmem>>, vector<1x16x32xf32>
    %3 = vector.shape_cast %2 : vector<1x16x32xf32> to vector<16x32xf32>
    %cst = arith.constant dense<0.000000e+00> : vector<2x32xf32>
    %4 = tpu.matmul %1, %3, %cst {dimension_numbers = #tpu.dot_dimension_numbers<[1], [0], [0], [1], [0, 0, 1, 1], [], []>} : vector<2x16xf32>, vector<16x32xf32>, vector<2x32xf32> -> vector<2x32xf32>
    %c1 = arith.constant 1 : index
    %c0_5 = arith.constant 0 : index
    %c0_6 = arith.constant 0 : index
    %5 = vector.load %arg1[%c1, %c0_5, %c0_6] : memref<2x2x16xf32, #tpu.memory_space<vmem>>, vector<1x2x16xf32>
    %6 = vector.shape_cast %5 : vector<1x2x16xf32> to vector<2x16xf32>
    %c1_7 = arith.constant 1 : index
    %c0_8 = arith.constant 0 : index
    %c0_9 = arith.constant 0 : index
    %7 = vector.load %arg5[%c1_7, %c0_8, %c0_9] : memref<2x16x32xf32, #tpu.memory_space<vmem>>, vector<1x16x32xf32>
    %8 = vector.shape_cast %7 : vector<1x16x32xf32> to vector<16x32xf32>
    %cst_10 = arith.constant dense<0.000000e+00> : vector<2x32xf32>
    %9 = tpu.matmul %6, %8, %cst_10 {dimension_numbers = #tpu.dot_dimension_numbers<[1], [0], [0], [1], [0, 0, 1, 1], [], []>} : vector<2x16xf32>, vector<16x32xf32>, vector<2x32xf32> -> vector<2x32xf32>
    %10 = arith.addf %4, %9 : vector<2x32xf32>
    %c0_11 = arith.constant 0 : index
    %c0_12 = arith.constant 0 : index
    %c0_13 = arith.constant 0 : index
    %11 = vector.load %arg0[%c0_11, %c0_12, %c0_13] : memref<2x16x1xf32, #tpu.memory_space<vmem>>, vector<2x16x1xf32>
    %c0_14 = arith.constant 0 : index
    %c0_15 = arith.constant 0 : index
    %12 = vector.load %arg4[%c0_14, %c0_15] : memref<5x32xf32, #tpu.memory_space<vmem>>, vector<5x32xf32>
    %13 = tpu.iota {dimensions = array<i32: 1>} : vector<2x16x1xi32>
    %14 = vector.extract_strided_slice %12 {offsets = [2, 0], sizes = [1, 32], strides = [1, 1]} : vector<5x32xf32> to vector<1x32xf32>
    %15 = vector.shape_cast %14 : vector<1x32xf32> to vector<32xf32>
    %16 = vector.shape_cast %15 : vector<32xf32> to vector<1x1x32xf32>
    %17 = vector.broadcast %11 : vector<2x16x1xf32> to vector<2x16x32xf32>
    %18 = vector.broadcast %16 : vector<1x1x32xf32> to vector<2x16x32xf32>
    %19 = arith.mulf %17, %18 : vector<2x16x32xf32>
    %c2_i32 = arith.constant 2 : i32
    %20 = tpu.dynamic_rotate %11 by %c2_i32 dim 1 : vector<2x16x1xf32>, i32 -> vector<2x16x1xf32>
    %c2_i32_16 = arith.constant 2 : i32
    %21 = vector.broadcast %c2_i32_16 : i32 to vector<2x16x1xi32>
    %22 = arith.cmpi sge, %13, %21 : vector<2x16x1xi32>
    %c18_i32 = arith.constant 18 : i32
    %23 = vector.broadcast %c18_i32 : i32 to vector<2x16x1xi32>
    %24 = arith.cmpi slt, %13, %23 : vector<2x16x1xi32>
    %25 = arith.andi %22, %24 : vector<2x16x1xi1>
    %cst_17 = arith.constant 0.000000e+00 : f32
    %26 = vector.broadcast %cst_17 : f32 to vector<2x16x1xf32>
    %27 = arith.select %25, %20, %26 : vector<2x16x1xi1>, vector<2x16x1xf32>
    %28 = vector.extract_strided_slice %12 {offsets = [0, 0], sizes = [1, 32], strides = [1, 1]} : vector<5x32xf32> to vector<1x32xf32>
    %29 = vector.shape_cast %28 : vector<1x32xf32> to vector<32xf32>
    %30 = vector.shape_cast %29 : vector<32xf32> to vector<1x1x32xf32>
    %31 = vector.broadcast %27 : vector<2x16x1xf32> to vector<2x16x32xf32>
    %32 = vector.broadcast %30 : vector<1x1x32xf32> to vector<2x16x32xf32>
    %33 = arith.mulf %31, %32 : vector<2x16x32xf32>
    %34 = arith.addf %19, %33 : vector<2x16x32xf32>
    %c1_i32 = arith.constant 1 : i32
    %35 = tpu.dynamic_rotate %11 by %c1_i32 dim 1 : vector<2x16x1xf32>, i32 -> vector<2x16x1xf32>
    %c1_i32_18 = arith.constant 1 : i32
    %36 = vector.broadcast %c1_i32_18 : i32 to vector<2x16x1xi32>
    %37 = arith.cmpi sge, %13, %36 : vector<2x16x1xi32>
    %c17_i32 = arith.constant 17 : i32
    %38 = vector.broadcast %c17_i32 : i32 to vector<2x16x1xi32>
    %39 = arith.cmpi slt, %13, %38 : vector<2x16x1xi32>
    %40 = arith.andi %37, %39 : vector<2x16x1xi1>
    %cst_19 = arith.constant 0.000000e+00 : f32
    %41 = vector.broadcast %cst_19 : f32 to vector<2x16x1xf32>
    %42 = arith.select %40, %35, %41 : vector<2x16x1xi1>, vector<2x16x1xf32>
    %43 = vector.extract_strided_slice %12 {offsets = [1, 0], sizes = [1, 32], strides = [1, 1]} : vector<5x32xf32> to vector<1x32xf32>
    %44 = vector.shape_cast %43 : vector<1x32xf32> to vector<32xf32>
    %45 = vector.shape_cast %44 : vector<32xf32> to vector<1x1x32xf32>
    %46 = vector.broadcast %42 : vector<2x16x1xf32> to vector<2x16x32xf32>
    %47 = vector.broadcast %45 : vector<1x1x32xf32> to vector<2x16x32xf32>
    %48 = arith.mulf %46, %47 : vector<2x16x32xf32>
    %49 = arith.addf %34, %48 : vector<2x16x32xf32>
    %c15_i32 = arith.constant 15 : i32
    %50 = tpu.dynamic_rotate %11 by %c15_i32 dim 1 : vector<2x16x1xf32>, i32 -> vector<2x16x1xf32>
    %c-1_i32 = arith.constant -1 : i32
    %51 = vector.broadcast %c-1_i32 : i32 to vector<2x16x1xi32>
    %52 = arith.cmpi sge, %13, %51 : vector<2x16x1xi32>
    %c15_i32_20 = arith.constant 15 : i32
    %53 = vector.broadcast %c15_i32_20 : i32 to vector<2x16x1xi32>
    %54 = arith.cmpi slt, %13, %53 : vector<2x16x1xi32>
    %55 = arith.andi %52, %54 : vector<2x16x1xi1>
    %cst_21 = arith.constant 0.000000e+00 : f32
    %56 = vector.broadcast %cst_21 : f32 to vector<2x16x1xf32>
    %57 = arith.select %55, %50, %56 : vector<2x16x1xi1>, vector<2x16x1xf32>
    %58 = vector.extract_strided_slice %12 {offsets = [3, 0], sizes = [1, 32], strides = [1, 1]} : vector<5x32xf32> to vector<1x32xf32>
    %59 = vector.shape_cast %58 : vector<1x32xf32> to vector<32xf32>
    %60 = vector.shape_cast %59 : vector<32xf32> to vector<1x1x32xf32>
    %61 = vector.broadcast %57 : vector<2x16x1xf32> to vector<2x16x32xf32>
    %62 = vector.broadcast %60 : vector<1x1x32xf32> to vector<2x16x32xf32>
    %63 = arith.mulf %61, %62 : vector<2x16x32xf32>
    %64 = arith.addf %49, %63 : vector<2x16x32xf32>
    %c14_i32 = arith.constant 14 : i32
    %65 = tpu.dynamic_rotate %11 by %c14_i32 dim 1 : vector<2x16x1xf32>, i32 -> vector<2x16x1xf32>
    %c-2_i32 = arith.constant -2 : i32
    %66 = vector.broadcast %c-2_i32 : i32 to vector<2x16x1xi32>
    %67 = arith.cmpi sge, %13, %66 : vector<2x16x1xi32>
    %c14_i32_22 = arith.constant 14 : i32
    %68 = vector.broadcast %c14_i32_22 : i32 to vector<2x16x1xi32>
    %69 = arith.cmpi slt, %13, %68 : vector<2x16x1xi32>
    %70 = arith.andi %67, %69 : vector<2x16x1xi1>
    %cst_23 = arith.constant 0.000000e+00 : f32
    %71 = vector.broadcast %cst_23 : f32 to vector<2x16x1xf32>
    %72 = arith.select %70, %65, %71 : vector<2x16x1xi1>, vector<2x16x1xf32>
    %73 = vector.extract_strided_slice %12 {offsets = [4, 0], sizes = [1, 32], strides = [1, 1]} : vector<5x32xf32> to vector<1x32xf32>
    %74 = vector.shape_cast %73 : vector<1x32xf32> to vector<32xf32>
    %75 = vector.shape_cast %74 : vector<32xf32> to vector<1x1x32xf32>
    %76 = vector.broadcast %72 : vector<2x16x1xf32> to vector<2x16x32xf32>
    %77 = vector.broadcast %75 : vector<1x1x32xf32> to vector<2x16x32xf32>
    %78 = arith.mulf %76, %77 : vector<2x16x32xf32>
    %79 = arith.addf %64, %78 : vector<2x16x32xf32>
    %80 = vector.shape_cast %10 : vector<2x32xf32> to vector<2x1x32xf32>
    %81 = vector.broadcast %80 : vector<2x1x32xf32> to vector<2x16x32xf32>
    %82 = arith.addf %81, %79 : vector<2x16x32xf32>
    %c0_24 = arith.constant 0 : index
    %c0_25 = arith.constant 0 : index
    %c0_26 = arith.constant 0 : index
    %83 = vector.load %arg2[%c0_24, %c0_25, %c0_26] : memref<2x16x32xf32, #tpu.memory_space<vmem>>, vector<2x16x32xf32>
    %84 = arith.addf %82, %83 : vector<2x16x32xf32>
    %85 = math.tanh %84 : vector<2x16x32xf32>
    %c0_27 = arith.constant 0 : index
    %c0_28 = arith.constant 0 : index
    %c0_29 = arith.constant 0 : index
    %86 = vector.load %arg6[%c0_27, %c0_28, %c0_29] : memref<1x1x32xf32, #tpu.memory_space<vmem>>, vector<1x1x32xf32>
    %87 = vector.broadcast %86 : vector<1x1x32xf32> to vector<2x16x32xf32>
    %88 = arith.mulf %85, %87 : vector<2x16x32xf32>
    %cst_30 = arith.constant dense<0.000000e+00> : vector<2x16xf32>
    %89 = vector.multi_reduction <add>, %88, %cst_30 [2] : vector<2x16x32xf32> to vector<2x16xf32>
    %90 = vector.shape_cast %89 : vector<2x16xf32> to vector<2x16x1xf32>
    %cst_31 = arith.constant dense<0xFF800000> : vector<2x1xf32>
    %91 = vector.multi_reduction <maximumf>, %90, %cst_31 [1] : vector<2x16x1xf32> to vector<2x1xf32>
    %92 = vector.shape_cast %91 : vector<2x1xf32> to vector<2x1x1xf32>
    %93 = vector.broadcast %92 : vector<2x1x1xf32> to vector<2x16x1xf32>
    %94 = arith.subf %90, %93 : vector<2x16x1xf32>
    %95 = math.exp %94 : vector<2x16x1xf32>
    %cst_32 = arith.constant dense<0.000000e+00> : vector<2x1xf32>
    %96 = vector.multi_reduction <add>, %95, %cst_32 [1] : vector<2x16x1xf32> to vector<2x1xf32>
    %97 = vector.shape_cast %96 : vector<2x1xf32> to vector<2x1x1xf32>
    %98 = tpu.reciprocal %97 : vector<2x1x1xf32> -> vector<2x1x1xf32>
    %99 = vector.broadcast %98 : vector<2x1x1xf32> to vector<2x16x1xf32>
    %100 = arith.mulf %95, %99 : vector<2x16x1xf32>
    %c0_33 = arith.constant 0 : index
    %c0_34 = arith.constant 0 : index
    %c0_35 = arith.constant 0 : index
    %101 = vector.load %arg3[%c0_33, %c0_34, %c0_35] : memref<2x16x32xf32, #tpu.memory_space<vmem>>, vector<2x16x32xf32>
    %102 = vector.broadcast %100 : vector<2x16x1xf32> to vector<2x16x32xf32>
    %103 = arith.mulf %101, %102 : vector<2x16x32xf32>
    %cst_36 = arith.constant dense<0.000000e+00> : vector<2x32xf32>
    %104 = vector.multi_reduction <add>, %103, %cst_36 [1] : vector<2x16x32xf32> to vector<2x32xf32>
    %105 = vector.shape_cast %104 : vector<2x32xf32> to vector<2x1x32xf32>
    %c0_37 = arith.constant 0 : index
    %c0_38 = arith.constant 0 : index
    %c0_39 = arith.constant 0 : index
    %106 = vector.load %arg7[%c0_37, %c0_38, %c0_39] : memref<2x1x32xf32, #tpu.memory_space<vmem>>, vector<2x1x32xf32>
    tpu.vector_store %arg7[%c0_37, %c0_38, %c0_39], %105 {strides = array<i32>} : memref<2x1x32xf32, #tpu.memory_space<vmem>>, vector<2x1x32xf32>,
    %c0_40 = arith.constant 0 : index
    %c0_41 = arith.constant 0 : index
    %c0_42 = arith.constant 0 : index
    %107 = vector.load %arg8[%c0_40, %c0_41, %c0_42] : memref<2x16x1xf32, #tpu.memory_space<vmem>>, vector<2x16x1xf32>
    tpu.vector_store %arg8[%c0_40, %c0_41, %c0_42], %100 {strides = array<i32>} : memref<2x16x1xf32, #tpu.memory_space<vmem>>, vector<2x16x1xf32>,
    return
  }
}

</mosaic_0001>

<llo_original>
// kernel: tpu_custom_call.1
$region0: #{tpu_custom_call.1}
  #allocation0 [shape = 'u32[]', space=smem, size = 0x4, offset = 0x4, fixed_abs, tag = 'smem constant byte address 0x4 - core index']
  #allocation1 [shape = 'u32[144,128]{1,0:T(1,128)}', space=vmem, size = 0x12000, scoped, tag = 'internal scratch']
  %s0 = inlined_call_operand.vmem [shape: f32[2,16,1], index: 0, kind: input, shape index: {}]
  %s1 = inlined_call_operand.hbm [shape: f32[2,2,16], index: 1, kind: input, shape index: {}]
  %s2 = inlined_call_operand.vmem [shape: f32[2,16,32], index: 2, kind: input, shape index: {}]
  %s3 = inlined_call_operand.hbm [shape: f32[2,16,32], index: 3, kind: input, shape index: {}]
  %s4 = inlined_call_operand.vmem [shape: f32[5,32], index: 4, kind: input, shape index: {}]
  %s5 = inlined_call_operand.hbm [shape: f32[2,16,32], index: 5, kind: input, shape index: {}]
  %s6 = inlined_call_operand.vmem [shape: f32[1,1,32], index: 6, kind: input, shape index: {}]
  %s7 = inlined_call_operand.hbm [shape: f32[2,1,32], index: 7, kind: output, shape index: {0}]
  %s8 = inlined_call_operand.vmem [shape: f32[2,16,1], index: 8, kind: output, shape index: {1}]
  %9 = xla_tuple %s7, %s8
  %s10 = sld [smem:[#allocation0]]
  $region58: #{tpu_custom_call.1} parent=0
    _
  %s12 = ssub.s32 1, %s10
  %s13 = scalar_select 0, %s12, %s10
  $region1: #{tpu_custom_call.1} parent=0
    #allocation2 [shape = 'u8[2048]{0}', space=vmem, size = 0x800, scoped, tag = 'input window, operand 1, single buffered']
    #allocation3 [shape = 's32[1]{0}', space=sflag, size = 0x4, scoped, tag = 'scoped memory for tpu_custom_call.1']
    #allocation4 [shape = 's32[1]{0}', space=sflag, size = 0x4, scoped, tag = 'scoped memory for tpu_custom_call.1']
    #allocation5 [shape = 'u8[16384]{0}', space=vmem, size = 0x4000, scoped, tag = 'input window, operand 3, single buffered']
    #allocation6 [shape = 's32[1]{0}', space=sflag, size = 0x4, scoped, tag = 'scoped memory for tpu_custom_call.1']
    #allocation7 [shape = 'u8[16384]{0}', space=vmem, size = 0x4000, scoped, tag = 'input window, operand 5, single buffered']
    #allocation8 [shape = 'u8[1024]{0}', space=vmem, size = 0x400, scoped, tag = 'output window, operand 0, single buffered']
    %14 = vsyncpa [#allocation3], 0
    %15 = vsyncpa [#allocation6], 0
    %16 = vsyncpa [#allocation4], 0
    // Predicated region
    $region2: #{tpu_custom_call.1} parent=1 // pred_check
      _
    $region3: #{tpu_custom_call.1} parent=1 // pred_check_branch
      %18 = sbr.rel (0) target = $region5
    $region4: #{tpu_custom_call.1} parent=1 // pred_region
      _
    $region5: #{tpu_custom_call.1} parent=1 // pred_fallthru
      _
    // Predicated region
    $region6: #{tpu_custom_call.1} parent=1 // pred_check
      _
    $region7: #{tpu_custom_call.1} parent=1 // pred_check_branch
      %20 = sbr.rel (0) target = $region9
    $region8: #{tpu_custom_call.1} parent=1 // pred_region
      %s22 = ssub.s32 64, 64
      %23 = vsyncadd [#allocation3], %s22
      %s24 = sshll.u32 [#allocation2], 4
      %s25 = int_to_ptr.vmem [resolvable:$true] %s24
      %30 = dma.hbm_to_vmem [thread:$0]  %s1, 64, %s25, [#allocation3], 32, 32, 2
    $region9: #{tpu_custom_call.1} parent=1 // pred_fallthru
      _
    // Predicated region
    $region10: #{tpu_custom_call.1} parent=1 // pred_check
      _
    $region11: #{tpu_custom_call.1} parent=1 // pred_check_branch
      %32 = sbr.rel (0) target = $region13
    $region12: #{tpu_custom_call.1} parent=1 // pred_region
      _
    $region13: #{tpu_custom_call.1} parent=1 // pred_fallthru
      _
    // Predicated region
    $region14: #{tpu_custom_call.1} parent=1 // pred_check
      _
    $region15: #{tpu_custom_call.1} parent=1 // pred_check_branch
      %34 = sbr.rel (0) target = $region17
    $region16: #{tpu_custom_call.1} parent=1 // pred_region
      %s36 = ssub.s32 512, 512
      %37 = vsyncadd [#allocation6], %s36
      %s38 = sshll.u32 [#allocation5], 4
      %s39 = int_to_ptr.vmem [resolvable:$true] %s38
      %44 = dma.hbm_to_vmem [thread:$0]  %s3, 512, %s39, [#allocation6], 128, 128, 8
    $region17: #{tpu_custom_call.1} parent=1 // pred_fallthru
      _
    // Predicated region
    $region18: #{tpu_custom_call.1} parent=1 // pred_check
      _
    $region19: #{tpu_custom_call.1} parent=1 // pred_check_branch
      %46 = sbr.rel (0) target = $region21
    $region20: #{tpu_custom_call.1} parent=1 // pred_region
      _
    $region21: #{tpu_custom_call.1} parent=1 // pred_fallthru
      _
    // Predicated region
    $region22: #{tpu_custom_call.1} parent=1 // pred_check
      _
    $region23: #{tpu_custom_call.1} parent=1 // pred_check_branch
      %48 = sbr.rel (0) target = $region25
    $region24: #{tpu_custom_call.1} parent=1 // pred_region
      %s50 = ssub.s32 512, 512
      %51 = vsyncadd [#allocation6], %s50
      %s52 = sshll.u32 [#allocation7], 4
      %s53 = int_to_ptr.vmem [resolvable:$true] %s52
      %58 = dma.hbm_to_vmem [thread:$0]  %s5, 512, %s53, [#allocation6], 128, 128, 8
    $region25: #{tpu_custom_call.1} parent=1 // pred_fallthru
      _
    // Predicated region
    $region26: #{tpu_custom_call.1} parent=1 // pred_check
      _
    $region27: #{tpu_custom_call.1} parent=1 // pred_check_branch
      %60 = sbr.rel (0) target = $region29
    $region28: #{tpu_custom_call.1} parent=1 // pred_region
      _
    $region29: #{tpu_custom_call.1} parent=1 // pred_fallthru
      _
    // Predicated region
    $region30: #{tpu_custom_call.1} parent=1 // pred_check
      _
    $region31: #{tpu_custom_call.1} parent=1 // pred_check_branch
      %62 = sbr.rel (0) target = $region33
    $region32: #{tpu_custom_call.1} parent=1 // pred_region
      %63 = dma.done [#allocation3], 64
    $region33: #{tpu_custom_call.1} parent=1 // pred_fallthru
      _
    // Predicated region
    $region34: #{tpu_custom_call.1} parent=1 // pred_check
      _
    $region35: #{tpu_custom_call.1} parent=1 // pred_check_branch
      %65 = sbr.rel (0) target = $region37
    $region36: #{tpu_custom_call.1} parent=1 // pred_region
      %66 = dma.done [#allocation6], 512
    $region37: #{tpu_custom_call.1} parent=1 // pred_fallthru
      _
    // Predicated region
    $region38: #{tpu_custom_call.1} parent=1 // pred_check
      _
    $region39: #{tpu_custom_call.1} parent=1 // pred_check_branch
      %68 = sbr.rel (0) target = $region41
    $region40: #{tpu_custom_call.1} parent=1 // pred_region
      %69 = dma.done [#allocation6], 512
    $region41: #{tpu_custom_call.1} parent=1 // pred_fallthru
      _
    %v70 = vld [vmem:[#allocation2] sm:$0x3]
    %v71 = vld [vmem:[#allocation7] sm:$0xff]
    %v72 = vld [vmem:[#allocation7 + $0x8] sm:$0xff]
    %s73 = scalar_lea.vmem [#allocation2], 2
    %v74 = vld [vmem:[%s73] sm:$0x3]
    %s75 = scalar_lea.vmem [#allocation7], 16
    %v76 = vld [vmem:[%s75] sm:$0xff]
    %v77 = vld [vmem:[%s75 + $0x8] sm:$0xff]
    %vm78 = vcmask 130048
    %v80 = vsel %vm78, %v74, 0
    %82 = vmatprep.subr.mxu0 0.0
    %83 = vmatpush1.msra.mxu0 0.0
    %84 = vmatprep.subr.mxu0 0.0
    %85 = vmatpush1.msra.mxu0 0.0
    %86 = vmatprep.subr.mxu0 0.0
    %87 = vmatpush1.msra.mxu0 0.0
    %88 = vmatprep.subr.mxu0 0.0
    %89 = vmatpush1.msra.mxu0 0.0
    %90 = vmatprep.subr.mxu0 0.0
    %91 = vmatpush1.msra.mxu0 0.0
    %92 = vmatprep.subr.mxu0 0.0
    %93 = vmatpush1.msra.mxu0 0.0
    %94 = vmatprep.subr.mxu0 0.0
    %95 = vmatpush1.msra.mxu0 0.0
    %96 = vmatprep.subr.mxu0 0.0
    %97 = vmatpush1.msra.mxu0 0.0
    %98 = vmatprep.subr.mxu0 0.0
    %99 = vmatpush1.msra.mxu0 0.0
    %100 = vmatprep.subr.mxu0 0.0
    %101 = vmatpush1.msra.mxu0 0.0
    %102 = vmatprep.subr.mxu0 0.0
    %103 = vmatpush1.msra.mxu0 0.0
    %104 = vmatprep.subr.mxu0 0.0
    %105 = vmatpush1.msra.mxu0 0.0
    %106 = vmatprep.subr.mxu0 0.0
    %107 = vmatpush1.msra.mxu0 0.0
    %108 = vmatprep.subr.mxu0 0.0
    %109 = vmatpush1.msra.mxu0 0.0
    %110 = vmatprep.subr.mxu0 0.0
    %111 = vmatpush1.msra.mxu0 %v77
    %112 = vmatprep.subr.mxu0 0.0
    %113 = vmatpush1.msra.mxu0 %v76
    %114 = vmatprep.subr.mxu0 0.0
    %115 = vmatpush2.msra.mxu0 0.0
    %116 = vmatprep.subr.mxu0 0.0
    %117 = vmatpush2.msra.mxu0 0.0
    %118 = vmatprep.subr.mxu0 0.0
    %119 = vmatpush2.msra.mxu0 0.0
    %120 = vmatprep.subr.mxu0 0.0
    %121 = vmatpush2.msra.mxu0 0.0
    %122 = vmatprep.subr.mxu0 0.0
    %123 = vmatpush2.msra.mxu0 0.0
    %124 = vmatprep.subr.mxu0 0.0
    %125 = vmatpush2.msra.mxu0 0.0
    %126 = vmatprep.subr.mxu0 0.0
    %127 = vmatpush2.msra.mxu0 0.0
    %128 = vmatprep.subr.mxu0 0.0
    %129 = vmatpush2.msra.mxu0 0.0
    %130 = vmatprep.subr.mxu0 0.0
    %131 = vmatpush2.msra.mxu0 0.0
    %132 = vmatprep.subr.mxu0 0.0
    %133 = vmatpush2.msra.mxu0 0.0
    %134 = vmatprep.subr.mxu0 0.0
    %135 = vmatpush2.msra.mxu0 0.0
    %136 = vmatprep.subr.mxu0 0.0
    %137 = vmatpush2.msra.mxu0 0.0
    %138 = vmatprep.subr.mxu0 0.0
    %139 = vmatpush2.msra.mxu0 0.0
    %140 = vmatprep.subr.mxu0 0.0
    %141 = vmatpush2.msra.mxu0 0.0
    %142 = vmatprep.subr.mxu0 0.0
    %143 = vmatpush2.msra.mxu0 0.0
    %144 = vmatprep.subr.mxu0 0.0
    %145 = vmatpush2.msra.mxu0 0.0
    %146 = vmatprep.mubr.f32.mxu0 0.0
    %147 = vmatmul.mubr.f32.gmra.mxu0 %v80
    %v148 = vpop.f32.mrf.mxu0
    %v149 = vadd.f32 0.0, %v148
    %v150 = vpop.f32.mrf.mxu0
    %151 = vdwg.mxu0
    %v153 = vsel %vm78, %v70, 0
    %155 = vmatprep.subr.mxu0 0.0
    %156 = vmatpush1.msra.mxu0 0.0
    %157 = vmatprep.subr.mxu0 0.0
    %158 = vmatpush1.msra.mxu0 0.0
    %159 = vmatprep.subr.mxu0 0.0
    %160 = vmatpush1.msra.mxu0 0.0
    %161 = vmatprep.subr.mxu0 0.0
    %162 = vmatpush1.msra.mxu0 0.0
    %163 = vmatprep.subr.mxu0 0.0
    %164 = vmatpush1.msra.mxu0 0.0
    %165 = vmatprep.subr.mxu0 0.0
    %166 = vmatpush1.msra.mxu0 0.0
    %167 = vmatprep.subr.mxu0 0.0
    %168 = vmatpush1.msra.mxu0 0.0
    %169 = vmatprep.subr.mxu0 0.0
    %170 = vmatpush1.msra.mxu0 0.0
    %171 = vmatprep.subr.mxu0 0.0
    %172 = vmatpush1.msra.mxu0 0.0
    %173 = vmatprep.subr.mxu0 0.0
    %174 = vmatpush1.msra.mxu0 0.0
    %175 = vmatprep.subr.mxu0 0.0
    %176 = vmatpush1.msra.mxu0 0.0
    %177 = vmatprep.subr.mxu0 0.0
    %178 = vmatpush1.msra.mxu0 0.0
    %179 = vmatprep.subr.mxu0 0.0
    %180 = vmatpush1.msra.mxu0 0.0
    %181 = vmatprep.subr.mxu0 0.0
    %182 = vmatpush1.msra.mxu0 0.0
    %183 = vmatprep.subr.mxu0 0.0
    %184 = vmatpush1.msra.mxu0 %v72
    %185 = vmatprep.subr.mxu0 0.0
    %186 = vmatpush1.msra.mxu0 %v71
    %187 = vmatprep.subr.mxu0 0.0
    %188 = vmatpush2.msra.mxu0 0.0
    %189 = vmatprep.subr.mxu0 0.0
    %190 = vmatpush2.msra.mxu0 0.0
    %191 = vmatprep.subr.mxu0 0.0
    %192 = vmatpush2.msra.mxu0 0.0
    %193 = vmatprep.subr.mxu0 0.0
    %194 = vmatpush2.msra.mxu0 0.0
    %195 = vmatprep.subr.mxu0 0.0
    %196 = vmatpush2.msra.mxu0 0.0
    %197 = vmatprep.subr.mxu0 0.0
    %198 = vmatpush2.msra.mxu0 0.0
    %199 = vmatprep.subr.mxu0 0.0
    %200 = vmatpush2.msra.mxu0 0.0
    %201 = vmatprep.subr.mxu0 0.0
    %202 = vmatpush2.msra.mxu0 0.0
    %203 = vmatprep.subr.mxu0 0.0
    %204 = vmatpush2.msra.mxu0 0.0
    %205 = vmatprep.subr.mxu0 0.0
    %206 = vmatpush2.msra.mxu0 0.0
    %207 = vmatprep.subr.mxu0 0.0
    %208 = vmatpush2.msra.mxu0 0.0
    %209 = vmatprep.subr.mxu0 0.0
    %210 = vmatpush2.msra.mxu0 0.0
    %211 = vmatprep.subr.mxu0 0.0
    %212 = vmatpush2.msra.mxu0 0.0
    %213 = vmatprep.subr.mxu0 0.0
    %214 = vmatpush2.msra.mxu0 0.0
    %215 = vmatprep.subr.mxu0 0.0
    %216 = vmatpush2.msra.mxu0 0.0
    %217 = vmatprep.subr.mxu0 0.0
    %218 = vmatpush2.msra.mxu0 0.0
    %219 = vmatprep.mubr.f32.mxu0 0.0
    %220 = vmatmul.mubr.f32.gmra.mxu0 %v153
    %v221 = vpop.f32.mrf.mxu0
    %v222 = vadd.f32 %v149, %v221
    %v223 = vpop.f32.mrf.mxu0
    %224 = vdwg.mxu0
    %v225 = vld [vmem:[%s0] sm:$0xff]
    %v226 = vld [vmem:[%s0 + $0x8] sm:$0xff]
    %v227 = vld [vmem:[%s0 + $0x10] sm:$0xff]
    %v228 = vld [vmem:[%s0 + $0x18] sm:$0xff]
    %v229 = vld [vmem:[%s4] sm:$0x1f]
    %v230 = vlaneseq
    %v231 = vshrl.u32 %v230, 7
    %v232 = vadd.s32 %v231, 8
    %234 = vset.pattern.permute.xlu0 0
    %235 = vperm.xlu0 %234, %v225
    %v236 = vpop.permute.xlu0 %235
    %239 = vset.pattern.permute.xlu0 0
    %240 = vperm.xlu0 %239, %v226
    %v241 = vpop.permute.xlu0 %240
    %244 = vset.pattern.permute.xlu0 0
    %245 = vperm.xlu0 %244, %v227
    %v246 = vpop.permute.xlu0 %245
    %249 = vset.pattern.permute.xlu0 0
    %250 = vperm.xlu0 %249, %v228
    %v251 = vpop.permute.xlu0 %250
    %v253 = vlaneseq
    %v254 = vshrl.u32 %v253, 7
    %v255 = vsub.s32 2, %v254
    %v256 = vrot.slane %v229, %v255
    %v257 = vmul.f32 %v236, %v256
    %v258 = vmul.f32 %v241, %v256
    %v259 = vmul.f32 %v246, %v256
    %v260 = vmul.f32 %v251, %v256
    %v261 = vrot.slane %v225, 6
    %v262 = vrot.slane %v227, 6
    %v263 = vrot.slane %v226, 6
    %v264 = vrot.slane %v228, 6
    %vm265 = vcmp.lt.s32.totalorder %v231, 2
    %v266 = vsel %vm265, %v261, %v263
    %v267 = vsel %vm265, %v262, %v264
    %v268 = vsel %vm265, %v263, %v261
    %v269 = vsel %vm265, %v264, %v262
    %vm270 = vcmp.ge.s32.totalorder %v231, 2
    %vm271 = vcmp.ge.s32.totalorder %v232, 2
    %vm272 = vcmp.lt.s32.totalorder %v231, 18
    %vm273 = vcmp.lt.s32.totalorder %v232, 18
    %vm274 = vmand %vm270, %vm272
    %vm275 = vmand %vm271, %vm273
    %v276 = vsel %vm274, %v268, 0.0
    %v277 = vsel %vm275, %v266, 0.0
    %v278 = vsel %vm274, %v269, 0.0
    %v279 = vsel %vm275, %v267, 0.0
    %281 = vset.pattern.permute.xlu0 0
    %282 = vperm.xlu0 %281, %v276
    %v283 = vpop.permute.xlu0 %282
    %286 = vset.pattern.permute.xlu0 0
    %287 = vperm.xlu0 %286, %v277
    %v288 = vpop.permute.xlu0 %287
    %291 = vset.pattern.permute.xlu0 0
    %292 = vperm.xlu0 %291, %v278
    %v293 = vpop.permute.xlu0 %292
    %296 = vset.pattern.permute.xlu0 0
    %297 = vperm.xlu0 %296, %v279
    %v298 = vpop.permute.xlu0 %297
    %v300 = vlaneseq
    %v301 = vshrl.u32 %v300, 7
    %v302 = vsub.s32 0, %v301
    %v303 = vrot.slane %v229, %v302
    %v304 = vmul.f32 %v283, %v303
    %v305 = vmul.f32 %v288, %v303
    %v306 = vmul.f32 %v293, %v303
    %v307 = vmul.f32 %v298, %v303
    %v308 = vadd.f32 %v257, %v304
    %v309 = vadd.f32 %v258, %v305
    %v310 = vadd.f32 %v259, %v306
    %v311 = vadd.f32 %v260, %v307
    %v312 = vrot.slane %v225, 7
    %v313 = vrot.slane %v227, 7
    %v314 = vrot.slane %v226, 7
    %v315 = vrot.slane %v228, 7
    %vm316 = vcmp.lt.s32.totalorder %v231, 1
    %v317 = vsel %vm316, %v312, %v314
    %v318 = vsel %vm316, %v313, %v315
    %v319 = vsel %vm316, %v314, %v312
    %v320 = vsel %vm316, %v315, %v313
    %vm321 = vcmp.ge.s32.totalorder %v231, 1
    %vm322 = vcmp.ge.s32.totalorder %v232, 1
    %vm323 = vcmp.lt.s32.totalorder %v231, 17
    %vm324 = vcmp.lt.s32.totalorder %v232, 17
    %vm325 = vmand %vm321, %vm323
    %vm326 = vmand %vm322, %vm324
    %v327 = vsel %vm325, %v319, 0.0
    %v328 = vsel %vm326, %v317, 0.0
    %v329 = vsel %vm325, %v320, 0.0
    %v330 = vsel %vm326, %v318, 0.0
    %332 = vset.pattern.permute.xlu0 0
    %333 = vperm.xlu0 %332, %v327
    %v334 = vpop.permute.xlu0 %333
    %337 = vset.pattern.permute.xlu0 0
    %338 = vperm.xlu0 %337, %v328
    %v339 = vpop.permute.xlu0 %338
    %342 = vset.pattern.permute.xlu0 0
    %343 = vperm.xlu0 %342, %v329
    %v344 = vpop.permute.xlu0 %343
    %347 = vset.pattern.permute.xlu0 0
    %348 = vperm.xlu0 %347, %v330
    %v349 = vpop.permute.xlu0 %348
    %v351 = vlaneseq
    %v352 = vshrl.u32 %v351, 7
    %v353 = vsub.s32 1, %v352
    %v354 = vrot.slane %v229, %v353
    %v355 = vmul.f32 %v334, %v354
    %v356 = vmul.f32 %v339, %v354
    %v357 = vmul.f32 %v344, %v354
    %v358 = vmul.f32 %v349, %v354
    %v359 = vadd.f32 %v308, %v355
    %v360 = vadd.f32 %v309, %v356
    %v361 = vadd.f32 %v310, %v357
    %v362 = vadd.f32 %v311, %v358
    %v363 = vrot.slane %v225, 1
    %v364 = vrot.slane %v227, 1
    %v365 = vrot.slane %v226, 1
    %v366 = vrot.slane %v228, 1
    %vm367 = vcmp.lt.s32.totalorder %v231, 7
    %v368 = vsel %vm367, %v363, %v365
    %v369 = vsel %vm367, %v364, %v366
    %v370 = vsel %vm367, %v365, %v363
    %v371 = vsel %vm367, %v366, %v364
    %vm372 = vcmp.ge.s32.totalorder %v231, 4294967295
    %vm373 = vcmp.ge.s32.totalorder %v232, 4294967295
    %vm374 = vcmp.lt.s32.totalorder %v231, 15
    %vm375 = vcmp.lt.s32.totalorder %v232, 15
    %vm376 = vmand %vm372, %vm374
    %vm377 = vmand %vm373, %vm375
    %v378 = vsel %vm376, %v368, 0.0
    %v379 = vsel %vm377, %v370, 0.0
    %v380 = vsel %vm376, %v369, 0.0
    %v381 = vsel %vm377, %v371, 0.0
    %383 = vset.pattern.permute.xlu0 0
    %384 = vperm.xlu0 %383, %v378
    %v385 = vpop.permute.xlu0 %384
    %388 = vset.pattern.permute.xlu0 0
    %389 = vperm.xlu0 %388, %v379
    %v390 = vpop.permute.xlu0 %389
    %393 = vset.pattern.permute.xlu0 0
    %394 = vperm.xlu0 %393, %v380
    %v395 = vpop.permute.xlu0 %394
    %398 = vset.pattern.permute.xlu0 0
    %399 = vperm.xlu0 %398, %v381
    %v400 = vpop.permute.xlu0 %399
    %v402 = vlaneseq
    %v403 = vshrl.u32 %v402, 7
    %v404 = vsub.s32 3, %v403
    %v405 = vrot.slane %v229, %v404
    %v406 = vmul.f32 %v385, %v405
    %v407 = vmul.f32 %v390, %v405
    %v408 = vmul.f32 %v395, %v405
    %v409 = vmul.f32 %v400, %v405
    %v410 = vadd.f32 %v359, %v406
    %v411 = vadd.f32 %v360, %v407
    %v412 = vadd.f32 %v361, %v408
    %v413 = vadd.f32 %v362, %v409
    %v414 = vrot.slane %v225, 2
    %v415 = vrot.slane %v227, 2
    %v416 = vrot.slane %v226, 2
    %v417 = vrot.slane %v228, 2
    %vm418 = vcmp.lt.s32.totalorder %v231, 6
    %v419 = vsel %vm418, %v414, %v416
    %v420 = vsel %vm418, %v415, %v417
    %v421 = vsel %vm418, %v416, %v414
    %v422 = vsel %vm418, %v417, %v415
    %vm423 = vcmp.ge.s32.totalorder %v231, 4294967294
    %vm424 = vcmp.ge.s32.totalorder %v232, 4294967294
    %vm425 = vcmp.lt.s32.totalorder %v231, 14
    %vm426 = vcmp.lt.s32.totalorder %v232, 14
    %vm427 = vmand %vm423, %vm425
    %vm428 = vmand %vm424, %vm426
    %v429 = vsel %vm427, %v419, 0.0
    %v430 = vsel %vm428, %v421, 0.0
    %v431 = vsel %vm427, %v420, 0.0
    %v432 = vsel %vm428, %v422, 0.0
    %434 = vset.pattern.permute.xlu0 0
    %435 = vperm.xlu0 %434, %v429
    %v436 = vpop.permute.xlu0 %435
    %439 = vset.pattern.permute.xlu0 0
    %440 = vperm.xlu0 %439, %v430
    %v441 = vpop.permute.xlu0 %440
    %444 = vset.pattern.permute.xlu0 0
    %445 = vperm.xlu0 %444, %v431
    %v446 = vpop.permute.xlu0 %445
    %449 = vset.pattern.permute.xlu0 0
    %450 = vperm.xlu0 %449, %v432
    %v451 = vpop.permute.xlu0 %450
    %v453 = vlaneseq
    %v454 = vshrl.u32 %v453, 7
    %v455 = vsub.s32 4, %v454
    %v456 = vrot.slane %v229, %v455
    %v457 = vmul.f32 %v436, %v456
    %v458 = vmul.f32 %v441, %v456
    %v459 = vmul.f32 %v446, %v456
    %v460 = vmul.f32 %v451, %v456
    %v461 = vadd.f32 %v410, %v457
    %v462 = vadd.f32 %v411, %v458
    %v463 = vadd.f32 %v412, %v459
    %v464 = vadd.f32 %v413, %v460
    %v467 = vunpack.c.l.s4 1966171168
    %v468 = vunpack.c.0.s8 %v467
    %v469 = vlaneseq
    %v470 = vshrl.u32 %v469, 7
    %v471 = vsub.s32 %v468, %v470
    %v472 = vrot.slane %v222, %v471
    %v473 = vcombine.high %v472, %v472
    %v475 = vunpack.c.l.s4 1966171168
    %v476 = vunpack.c.0.s8 %v475
    %v477 = vlaneseq
    %v478 = vshrl.u32 %v477, 7
    %v479 = vsub.s32 %v476, %v478
    %v480 = vrot.slane %v472, %v479
    %v482 = vunpack.c.l.s4 1966171168
    %v483 = vunpack.c.0.s8 %v482
    %v484 = vlaneseq
    %v485 = vshrl.u32 %v484, 7
    %v486 = vsub.s32 %v483, %v485
    %v487 = vrot.slane %v473, %v486
    %v488 = vlaneseq
    %v489 = vshrl.u32 %v488, 7
    %v490 = vsub.s32 0, %v489
    %v491 = vrot.slane %v480, %v490
    %v492 = vlaneseq
    %v493 = vshrl.u32 %v492, 7
    %v494 = vsub.s32 0, %v493
    %v495 = vrot.slane %v487, %v494
    %v498 = vadd.f32 %v491, %v461
    %v499 = vadd.f32 %v491, %v462
    %v500 = vadd.f32 %v495, %v463
    %v501 = vadd.f32 %v495, %v464
    %v502 = vld [vmem:[%s2] sm:$0xff]
    %v503 = vld [vmem:[%s2 + $0x8] sm:$0xff]
    %v504 = vld [vmem:[%s2 + $0x10] sm:$0xff]
    %v505 = vld [vmem:[%s2 + $0x18] sm:$0xff]
    %v506 = vadd.f32 %v498, %v502
    %v507 = vadd.f32 %v499, %v503
    %v508 = vadd.f32 %v500, %v504
    %v509 = vadd.f32 %v501, %v505
    %v510 = vtanh.pop %v506
    %v511 = vtanh.pop %v507
    %v512 = vtanh.pop %v508
    %v513 = vtanh.pop %v509
    %v514 = vld [vmem:[%s6] sm:$0x1]
    %v516 = vlaneseq
    %v517 = vshrl.u32 %v516, 7
    %v518 = vsub.s32 0, %v517
    %v519 = vrot.slane %v514, %v518
    %v521 = vmul.f32 %v510, %v519
    %v522 = vmul.f32 %v511, %v519
    %v523 = vmul.f32 %v512, %v519
    %v524 = vmul.f32 %v513, %v519
    %vm525 = vcmask 261120
    %v526 = vsel %vm525, %v521, 0.0
    %527 = vadd.xlane.f32.xlu0 %v526
    %v528 = vpop.xlane.xlu0 %527
    %v529 = vsel %vm525, %v522, 0.0
    %530 = vadd.xlane.f32.xlu0 %v529
    %v531 = vpop.xlane.xlu0 %530
    %v532 = vsel %vm525, %v523, 0.0
    %533 = vadd.xlane.f32.xlu0 %v532
    %v534 = vpop.xlane.xlu0 %533
    %v535 = vsel %vm525, %v524, 0.0
    %536 = vadd.xlane.f32.xlu0 %v535
    %v537 = vpop.xlane.xlu0 %536
    %v538 = vmax.f32 %v528, %v531
    %v539 = vrot.slane %v538, 4
    %v540 = vmax.f32 %v538, %v539
    %v541 = vrot.slane %v540, 2
    %v542 = vmax.f32 %v540, %v541
    %v543 = vrot.slane %v542, 1
    %v544 = vmax.f32 %v542, %v543
    %v545 = vmax.f32 %v534, %v537
    %v546 = vrot.slane %v545, 4
    %v547 = vmax.f32 %v545, %v546
    %v548 = vrot.slane %v547, 2
    %v549 = vmax.f32 %v547, %v548
    %v550 = vrot.slane %v549, 1
    %v551 = vmax.f32 %v549, %v550
    %v552 = vsub.f32 %v528, %v544
    %v553 = vsub.f32 %v531, %v544
    %v554 = vsub.f32 %v534, %v551
    %v555 = vsub.f32 %v537, %v551
    %v556 = vmul.f32 %v552, 1.442695
    %v557 = vpow.pop %v556
    %v558 = vmul.f32 %v553, 1.442695
    %v559 = vpow.pop %v558
    %v560 = vmul.f32 %v554, 1.442695
    %v561 = vpow.pop %v560
    %v562 = vmul.f32 %v555, 1.442695
    %v563 = vpow.pop %v562
    %v564 = vadd.f32 %v557, %v559
    %v565 = vrot.slane %v564, 4
    %v566 = vadd.f32 %v564, %v565
    %v567 = vrot.slane %v566, 2
    %v568 = vadd.f32 %v566, %v567
    %v569 = vrot.slane %v568, 1
    %v570 = vadd.f32 %v568, %v569
    %v571 = vadd.f32 %v561, %v563
    %v572 = vrot.slane %v571, 4
    %v573 = vadd.f32 %v571, %v572
    %v574 = vrot.slane %v573, 2
    %v575 = vadd.f32 %v573, %v574
    %v576 = vrot.slane %v575, 1
    %v577 = vadd.f32 %v575, %v576
    %v578 = vrcp.pop %v570
    %v579 = vrcp.pop %v577
    %v580 = vmul.f32 %v557, %v578
    %v581 = vmul.f32 %v559, %v578
    %v582 = vmul.f32 %v561, %v579
    %v583 = vmul.f32 %v563, %v579
    %v584 = vld [vmem:[#allocation5] sm:$0xff]
    %v585 = vld [vmem:[#allocation5 + $0x8] sm:$0xff]
    %v586 = vld [vmem:[#allocation5 + $0x10] sm:$0xff]
    %v587 = vld [vmem:[#allocation5 + $0x18] sm:$0xff]
    %v588 = vmul.f32 %v584, %v580
    %v589 = vmul.f32 %v585, %v581
    %v590 = vmul.f32 %v586, %v582
    %v591 = vmul.f32 %v587, %v583
    %v592 = vsel %vm525, %v588, 0.0
    %v593 = vsel %vm525, %v589, 0.0
    %v594 = vadd.f32 %v592, %v593
    %v595 = vrot.slane %v594, 4
    %v596 = vadd.f32 %v594, %v595
    %v597 = vrot.slane %v596, 2
    %v598 = vadd.f32 %v596, %v597
    %v599 = vrot.slane %v598, 1
    %v600 = vadd.f32 %v598, %v599
    %v601 = vsel %vm525, %v590, 0.0
    %v602 = vsel %vm525, %v591, 0.0
    %v603 = vadd.f32 %v601, %v602
    %v604 = vrot.slane %v603, 4
    %v605 = vadd.f32 %v603, %v604
    %v606 = vrot.slane %v605, 2
    %v607 = vadd.f32 %v605, %v606
    %v608 = vrot.slane %v607, 1
    %v609 = vadd.f32 %v607, %v608
    %vm610 = vcmask 253952
    %611 = vst.msk [vmem:[#allocation8] sm:$0x1] %vm610, %v600
    %612 = vst.msk [vmem:[#allocation8 + $0x1] sm:$0x1] %vm610, %v609
    %vm613 = vcmask 7168
    %614 = vst.msk [vmem:[%s8] sm:$0xff] %vm613, %v580
    %615 = vst.msk [vmem:[%s8 + $0x8] sm:$0xff] %vm613, %v581
    %616 = vst.msk [vmem:[%s8 + $0x10] sm:$0xff] %vm613, %v582
    %617 = vst.msk [vmem:[%s8 + $0x18] sm:$0xff] %vm613, %v583
    // Predicated region
    $region42: #{tpu_custom_call.1} parent=1 // pred_check
      _
    $region43: #{tpu_custom_call.1} parent=1 // pred_check_branch
      %619 = sbr.rel (0) target = $region45
    $region44: #{tpu_custom_call.1} parent=1 // pred_region
      %s621 = ssub.s32 32, 32
      %622 = vsyncadd [#allocation4], %s621
      %s623 = sshll.u32 [#allocation8], 4
      %s624 = int_to_ptr.vmem [resolvable:$true] %s623
      %629 = dma.vmem_to_hbm [thread:$0]  %s624, 32, %s7, [#allocation4], 16, 16, 1
    $region45: #{tpu_custom_call.1} parent=1 // pred_fallthru
      _
    // Predicated region
    $region46: #{tpu_custom_call.1} parent=1 // pred_check
      _
    $region47: #{tpu_custom_call.1} parent=1 // pred_check_branch
      %631 = sbr.rel (0) target = $region49
    $region48: #{tpu_custom_call.1} parent=1 // pred_region
      _
    $region49: #{tpu_custom_call.1} parent=1 // pred_fallthru
      _
    // Predicated region
    $region50: #{tpu_custom_call.1} parent=1 // pred_check
      _
    $region51: #{tpu_custom_call.1} parent=1 // pred_check_branch
      %633 = sbr.rel (0) target = $region53
    $region52: #{tpu_custom_call.1} parent=1 // pred_region
      %634 = dma.done [#allocation4], 32
    $region53: #{tpu_custom_call.1} parent=1 // pred_fallthru
      _
    // Predicated region
    $region54: #{tpu_custom_call.1} parent=1 // pred_check
      _
    $region55: #{tpu_custom_call.1} parent=1 // pred_check_branch
      %636 = sbr.rel (0) target = $region57
    $region56: #{tpu_custom_call.1} parent=1 // pred_region
      _
    $region57: #{tpu_custom_call.1} parent=1 // pred_fallthru
      _
    %637 = vsyncpa [#allocation3], 1
    %638 = vsyncpa [#allocation6], 1
    %639 = vsyncpa [#allocation4], 1

</llo_original>
